<compile_context>
chip_gen: v5e
topology: v5e:2x2
jax: 0.10.0
libtpu: 0.0.40
codegen_flags: <defaults>
</compile_context>

<pallas_src>
import jax
import jax.numpy as jnp
from jax.experimental import pallas as pl
from jax.experimental.pallas import tpu as pltpu


def _linear_sigmoid_kernel(x_ref, w_ref, b_ref, o_ref):
    """One batch tile.

    x_ref: (tb, F) f32 VMEM  -- batch tile of the input
    w_ref: (8, F)  f32 VMEM  -- weight row replicated to 8 sublanes (resident)
    b_ref: (1, 1)  f32 SMEM  -- bias scalar
    o_ref: (1, tb) f32 VMEM  -- lane-dense output slab for this tile
    """
    # (8, F) x (tb, F)^T -> (8, tb): contracting the last dim of both operands
    # puts the batch dim on lanes, so the epilogue store is dense vst ops.
    s = jax.lax.dot_general(
        w_ref[...], x_ref[...],
        dimension_numbers=(((1,), (1,)), ((), ())),
        preferred_element_type=jnp.float32,
    )
    logits = s[0:1, :] + b_ref[0, 0]                 # (1, tb) + SMEM scalar bias
    # sigmoid written explicitly (exp on EUP + divide); equivalent to nn.Sigmoid.
    y = 1.0 / (1.0 + jnp.exp(-logits))
    o_ref[...] = y.astype(o_ref.dtype)


def _round_up(n, m):
    return ((n + m - 1) // m) * m


def _pick_batch_tile(B, F, itemsize):
    """VMEM-byte-budgeted batch tile.

    Budget assumes the (tb, F) VMEM block is lane-padded to 128 (worst case for
    small F) and targets ~8 MiB per buffer, so the double-buffered x tile stays
    ~16 MiB -- inside the explicit 32 MiB vmem limit with headroom on v5e/v6e
    (128 MiB physical) and v7x (64 MiB physical).
    """
    padded_row_bytes = max(_round_up(F, 128), 128) * itemsize
    target_bytes_per_buffer = 8 * 1024 * 1024
    tb = max(128, target_bytes_per_buffer // padded_row_bytes)
    tb = max((tb // 128) * 128, 128)   # multiple of 128 -> lane-dense out blocks
    # v7x has two TensorCores: for large batches keep >= 4 grid steps so the
    # "parallel" axis shards across both; never shrink below 2048 rows so tiles
    # stay well clear of the per-step-overhead-bound regime.
    while tb > 2048 and pl.cdiv(B, tb) < 4:
        tb //= 2
    if B <= tb:
        # Single block: smallest legal block covering the whole batch
        # (second-to-last block dim must be a multiple of 8 or the full dim).
        tb = B if B % 8 == 0 else _round_up(B, 8)
    return tb
    # NOTE: an extremely large feature dim (F >> 16K) would need a second (F)
    # grid axis; not needed for this module (single-logit linear head).


def linear_sigmoid(x, w, b):
    """y = sigmoid(x @ w + b)  (forward of nn.Linear(F, 1) + nn.Sigmoid).

    x: (B, F) f32;  w: (F, 1) f32 (transposed nn.Linear weight);  b: (1,) f32.
    Returns (B, 1) f32.
    """
    B, F = x.shape
    itemsize = jnp.dtype(x.dtype).itemsize
    tb = _pick_batch_tile(B, F, itemsize)
    grid_b = pl.cdiv(B, tb)            # ragged batch: tail block is OOB-padded

    # Weight row replicated to 8 sublanes (sublane-aligned MXU LHS, ~1 KiB).
    w8 = jnp.broadcast_to(w.reshape(1, F).astype(x.dtype), (8, F))
    b2 = b.reshape(1, 1).astype(jnp.float32)

    out = pl.pallas_call(
        _linear_sigmoid_kernel,
        out_shape=jax.ShapeDtypeStruct((1, grid_b * tb), x.dtype),
        grid=(grid_b,),
        in_specs=[
            pl.BlockSpec((tb, F), lambda i: (i, 0)),               # x batch tile
            pl.BlockSpec((8, F), lambda i: (0, 0)),                # resident weight
            pl.BlockSpec(memory_space=pltpu.MemorySpace.SMEM),     # bias scalar
        ],
        out_specs=pl.BlockSpec((1, tb), lambda i: (0, i)),         # lane-dense slab
        compiler_params=pltpu.CompilerParams(
            dimension_semantics=("parallel",),
            vmem_limit_bytes=32 * 1024 * 1024,
        ),
    )(x, w8, b2)
    # Drop tail padding and restore the module's (B, 1) output shape.
    return out[0, :B].reshape(B, 1)


if __name__ == "__main__":
    n_input_features = 32
    key = jax.random.PRNGKey(0)
    kx, kw, kb, kx2 = jax.random.split(key, 4)

    # Deterministic parameter init (shapes follow nn.Linear(n_input_features, 1)).
    bound = 1.0 / (n_input_features ** 0.5)
    w = jax.random.uniform(kw, (n_input_features, 1), jnp.float32, -bound, bound)
    b = jax.random.uniform(kb, (1,), jnp.float32, -bound, bound)

    def reference(xx):
        # Exact f32 elementwise reference (no matmul unit involved).
        return jax.nn.sigmoid(
            jnp.sum(xx * w.reshape(1, -1), axis=1, keepdims=True) + b.reshape(1, 1))

    # Small demo shape (single-block path), matching the module's forward.
    batch = 8
    x = jax.random.normal(kx, (batch, n_input_features), jnp.float32)
    y = linear_sigmoid(x, w, b)
    jax.block_until_ready(y)
    assert y.shape == (batch, 1)
    # Tolerance allows for the MXU's reduced-precision f32 passes.
    assert jnp.allclose(y, reference(x), atol=5e-3, rtol=5e-3), "small-batch mismatch"

    # Ragged multi-block batch: exercises the cdiv grid + padded tail block.
    batch2 = 6000
    x2 = jax.random.normal(kx2, (batch2, n_input_features), jnp.float32)
    y2 = linear_sigmoid(x2, w, b)
    jax.block_until_ready(y2)
    assert y2.shape == (batch2, 1)
    assert jnp.allclose(y2, reference(x2), atol=5e-3, rtol=5e-3), "multi-block mismatch"

    print("KERNEL_OK")
</pallas_src>

<mosaic_0001>
module attributes {stable_mosaic.version = 11 : i64} {
  func.func @_linear_sigmoid_kernel(%arg0: i32, %arg1: memref<8x32xf32, #tpu.memory_space<vmem>>, %arg2: memref<8x32xf32, #tpu.memory_space<vmem>>, %arg3: memref<1x1xf32, #tpu.memory_space<smem>>, %arg4: memref<1x8xf32, #tpu.memory_space<vmem>>) attributes {dimension_semantics = [#tpu.dimension_semantics<parallel>], iteration_bounds = array<i64: 1>, scalar_prefetch = 0 : i64, scratch_operands = 0 : i64, tpu.core_type = #tpu.core_type<tc>, window_params = [{transform_indices = @transform_0, window_bounds = array<i64: 8, 32>}, {pipeline_mode = #tpu.pipeline_mode<synchronous>, transform_indices = @transform_1, window_bounds = array<i64: 8, 32>}, {transform_indices = @transform_2, window_bounds = array<i64: 1, 1>}, {transform_indices = @transform_3, window_bounds = array<i64: 1, 8>}]} {
    %c0 = arith.constant 0 : index
    %c0_0 = arith.constant 0 : index
    %0 = vector.load %arg2[%c0, %c0_0] : memref<8x32xf32, #tpu.memory_space<vmem>>, vector<8x32xf32>
    %c0_1 = arith.constant 0 : index
    %c0_2 = arith.constant 0 : index
    %1 = vector.load %arg1[%c0_1, %c0_2] : memref<8x32xf32, #tpu.memory_space<vmem>>, vector<8x32xf32>
    %cst = arith.constant dense<0.000000e+00> : vector<8x8xf32>
    %2 = tpu.matmul %0, %1, %cst {dimension_numbers = #tpu.dot_dimension_numbers<[1], [1], [0], [0], [0, 0, 1, 0], [], []>} : vector<8x32xf32>, vector<8x32xf32>, vector<8x8xf32> -> vector<8x8xf32>
    %3 = vector.extract_strided_slice %2 {offsets = [0, 0], sizes = [1, 8], strides = [1, 1]} : vector<8x8xf32> to vector<1x8xf32>
    %c0_3 = arith.constant 0 : index
    %c0_4 = arith.constant 0 : index
    %4 = memref.load %arg3[%c0_3, %c0_4] : memref<1x1xf32, #tpu.memory_space<smem>>
    %5 = vector.broadcast %4 : f32 to vector<1x8xf32>
    %6 = arith.addf %3, %5 : vector<1x8xf32>
    %cst_5 = arith.constant 0.000000e+00 : f32
    %7 = vector.broadcast %cst_5 : f32 to vector<1x8xf32>
    %8 = arith.subf %7, %6 : vector<1x8xf32>
    %9 = math.exp %8 : vector<1x8xf32>
    %cst_6 = arith.constant 1.000000e+00 : f32
    %10 = vector.broadcast %cst_6 : f32 to vector<1x8xf32>
    %11 = arith.addf %10, %9 : vector<1x8xf32>
    %cst_7 = arith.constant 1.000000e+00 : f32
    %12 = vector.broadcast %cst_7 : f32 to vector<1x8xf32>
    %13 = arith.divf %12, %11 : vector<1x8xf32>
    %c0_8 = arith.constant 0 : index
    %c0_9 = arith.constant 0 : index
    %14 = vector.load %arg4[%c0_8, %c0_9] : memref<1x8xf32, #tpu.memory_space<vmem>>, vector<1x8xf32>
    tpu.vector_store %arg4[%c0_8, %c0_9], %13 {strides = array<i32>} : memref<1x8xf32, #tpu.memory_space<vmem>>, vector<1x8xf32>,
    return
  }
  func.func @transform_0(%arg0: i32) -> (i32, i32) {
    %c0_i32 = arith.constant 0 : i32
    %c0_i32_0 = arith.constant 0 : i32
    return %arg0, %c0_i32 : i32, i32
  }
  func.func @transform_1(%arg0: i32) -> (i32, i32) {
    %c0_i32 = arith.constant 0 : i32
    %c0_i32_0 = arith.constant 0 : i32
    %c0_i32_1 = arith.constant 0 : i32
    return %c0_i32, %c0_i32_0 : i32, i32
  }
  func.func @transform_2(%arg0: i32) -> (i32, i32) {
    %c0_i32 = arith.constant 0 : i32
    %c0_i32_0 = arith.constant 0 : i32
    %c0_i32_1 = arith.constant 0 : i32
    return %c0_i32, %c0_i32_0 : i32, i32
  }
  func.func @transform_3(%arg0: i32) -> (i32, i32) {
    %c0_i32 = arith.constant 0 : i32
    %c0_i32_0 = arith.constant 0 : i32
    return %c0_i32, %arg0 : i32, i32
  }
}

</mosaic_0001>

<llo_original>
// kernel: tpu_custom_call.1
$region0: #{tpu_custom_call.1}
  #allocation0 [shape = 'u32[]', space=smem, size = 0x4, offset = 0x4, fixed_abs, tag = 'smem constant byte address 0x4 - core index']
  #allocation1 [shape = 'u32[72,128]{1,0:T(1,128)}', space=vmem, size = 0x9000, scoped, tag = 'internal scratch']
  #allocation2 [shape = 'f32[1,1]{1,0:T(1,128)S(6)}', space=smem, size = 0x200, scoped, tag = 'scoped memory for tpu_custom_call.1']
  %s0 = inlined_call_operand.hbm [shape: f32[8,32], index: 0, kind: input, shape index: {}]
  %s1 = inlined_call_operand.hbm [shape: f32[8,32], index: 1, kind: input, shape index: {}]
  %s2 = inlined_call_operand.<no memory space> [shape: f32[1,1], index: 2, kind: input, shape index: {}]
  %s3 = inlined_call_operand.hbm [shape: f32[1,8], index: 3, kind: output, shape index: {}]
  %s4 = sld [smem:[#allocation0]]
  $region30: #{tpu_custom_call.1} parent=0
    _
  %s6 = ssub.s32 1, %s4
  %s7 = scalar_select 0, %s6, %s4
  %8 = sst [smem:[#allocation2]] %s2
  $region1: #{tpu_custom_call.1} parent=0
    #allocation3 [shape = 'u8[4096]{0}', space=vmem, size = 0x1000, scoped, tag = 'input window, operand 0, single buffered']
    #allocation4 [shape = 's32[1]{0}', space=sflag, size = 0x4, scoped, tag = 'scoped memory for tpu_custom_call.1']
    #allocation5 [shape = 's32[1]{0}', space=sflag, size = 0x4, scoped, tag = 'scoped memory for tpu_custom_call.1']
    #allocation6 [shape = 'u8[4096]{0}', space=vmem, size = 0x1000, scoped, tag = 'input window, operand 1, single buffered']
    #allocation7 [shape = 's32[1]{0}', space=sflag, size = 0x4, scoped, tag = 'scoped memory for tpu_custom_call.1']
    #allocation8 [shape = 'u8[512]{0}', space=vmem, size = 0x400, scoped, tag = 'output window, operand 0, single buffered']
    %9 = vsyncpa [#allocation4], 0
    %10 = vsyncpa [#allocation7], 0
    %11 = vsyncpa [#allocation5], 0
    // Predicated region
    $region2: #{tpu_custom_call.1} parent=1 // pred_check
      _
    $region3: #{tpu_custom_call.1} parent=1 // pred_check_branch
      %13 = sbr.rel (0) target = $region5
    $region4: #{tpu_custom_call.1} parent=1 // pred_region
      %15 = vsyncadd [#allocation4], 0
      %s17 = sshll.u32 %s0, 4
      %s18 = int_to_ptr.hbm [resolvable:$true] %s17
      %s19 = sshll.u32 [#allocation3], 4
      %s20 = int_to_ptr.vmem [resolvable:$true] %s19
      %22 = dma.hbm_to_vmem [thread:$0]  %s18, 128, %s20, [#allocation4]
    $region5: #{tpu_custom_call.1} parent=1 // pred_fallthru
      _
    // Predicated region
    $region6: #{tpu_custom_call.1} parent=1 // pred_check
      _
    $region7: #{tpu_custom_call.1} parent=1 // pred_check_branch
      %24 = sbr.rel (0) target = $region9
    $region8: #{tpu_custom_call.1} parent=1 // pred_region
      %26 = vsyncadd [#allocation7], 0
      %s28 = sshll.u32 %s1, 4
      %s29 = int_to_ptr.hbm [resolvable:$true] %s28
      %s30 = sshll.u32 [#allocation6], 4
      %s31 = int_to_ptr.vmem [resolvable:$true] %s30
      %33 = dma.hbm_to_vmem [thread:$0]  %s29, 128, %s31, [#allocation7]
    $region9: #{tpu_custom_call.1} parent=1 // pred_fallthru
      _
    // Predicated region
    $region10: #{tpu_custom_call.1} parent=1 // pred_check
      _
    $region11: #{tpu_custom_call.1} parent=1 // pred_check_branch
      %35 = sbr.rel (0) target = $region13
    $region12: #{tpu_custom_call.1} parent=1 // pred_region
      _
    $region13: #{tpu_custom_call.1} parent=1 // pred_fallthru
      _
    // Predicated region
    $region14: #{tpu_custom_call.1} parent=1 // pred_check
      _
    $region15: #{tpu_custom_call.1} parent=1 // pred_check_branch
      %37 = sbr.rel (0) target = $region17
    $region16: #{tpu_custom_call.1} parent=1 // pred_region
      %39 = dma.done [#allocation4], 128
    $region17: #{tpu_custom_call.1} parent=1 // pred_fallthru
      _
    // Predicated region
    $region18: #{tpu_custom_call.1} parent=1 // pred_check
      _
    $region19: #{tpu_custom_call.1} parent=1 // pred_check_branch
      %41 = sbr.rel (0) target = $region21
    $region20: #{tpu_custom_call.1} parent=1 // pred_region
      %43 = dma.done [#allocation7], 128
    $region21: #{tpu_custom_call.1} parent=1 // pred_fallthru
      _
    %v44 = vld [vmem:[#allocation6] sm:$0xff]
    %v45 = vld [vmem:[#allocation3] sm:$0xff]
    %vm46 = vcmask 261120
    %v48 = vsel %vm46, %v44, 0
    %v51 = vsel %vm46, %v45, 0
    %53 = vmatpush.xpose.msra.mxu0 0.0
    %54 = vmatpush.xpose.msra.mxu0 0.0
    %55 = vmatpush.xpose.msra.mxu0 0.0
    %56 = vmatpush.xpose.msra.mxu0 0.0
    %57 = vmatpush.xpose.msra.mxu0 0.0
    %58 = vmatpush.xpose.msra.mxu0 0.0
    %59 = vmatpush.xpose.msra.mxu0 0.0
    %60 = vmatpush.xpose.msra.mxu0 0.0
    %61 = vmatpush.xpose.msra.mxu0 0.0
    %62 = vmatpush.xpose.msra.mxu0 0.0
    %63 = vmatpush.xpose.msra.mxu0 0.0
    %64 = vmatpush.xpose.msra.mxu0 0.0
    %65 = vmatpush.xpose.msra.mxu0 0.0
    %66 = vmatpush.xpose.msra.mxu0 0.0
    %67 = vmatpush.xpose.msra.mxu0 0.0
    %68 = vmatpush.xpose.msra.mxu0 %v51
    %69 = vmatmul.f32.gmra.mxu0 %v48
    %v70 = vpop.f32.mrf.mxu0
    %v71 = vadd.f32 0.0, %v70
    %72 = vdwg.mxu0
    %s73 = sld [smem:[#allocation2]]
    %v74 = vstv %s73
    %v75 = vadd.f32 %v71, %v74
    %v76 = vsub.f32 0.0, %v75
    %v77 = vmul.f32 %v76, 1.442695
    %v78 = vpow.pop %v77
    %v79 = vadd.f32 %v78, 1.0
    %v80 = vrcp.pop %v79
    %v81 = vmul.f32 %v79, %v80
    %v82 = vsub.f32 1.0, %v81
    %v83 = vmul.f32 %v80, %v82
    %v84 = vadd.f32 %v80, %v83
    %vm85 = vweird.f32 %v79
    %vm86 = vweird.f32 %v80
    %vm87 = vmor %vm85, %vm86
    %v88 = vsel %vm87, %v80, %v84
    %v89 = vand.u32 2147483647, %v79
    %vm90 = vcmp.eq.f32.partialorder %v89, 8.507059e+37
    %v91 = vand.u32 %v79, 2147483648
    %v92 = vor.u32 1.1754944e-38, %v91
    %v93 = vsel %vm90, %v92, %v88
    %v94 = vmul.f32 1.0, %v93
    %vm95 = vcmask 57344
    %96 = vst.msk [vmem:[#allocation8] sm:$0x1] %vm95, %v94
    // Predicated region
    $region22: #{tpu_custom_call.1} parent=1 // pred_check
      _
    $region23: #{tpu_custom_call.1} parent=1 // pred_check_branch
      %98 = sbr.rel (0) target = $region25
    $region24: #{tpu_custom_call.1} parent=1 // pred_region
      %100 = vsyncadd [#allocation5], 0
      %s102 = sshll.u32 [#allocation8], 4
      %s103 = int_to_ptr.vmem [resolvable:$true] %s102
      %s104 = sshll.u32 %s3, 4
      %s105 = int_to_ptr.hbm [resolvable:$true] %s104
      %107 = dma.vmem_to_hbm [thread:$0]  %s103, 16, %s105, [#allocation5]
    $region25: #{tpu_custom_call.1} parent=1 // pred_fallthru
      _
    // Predicated region
    $region26: #{tpu_custom_call.1} parent=1 // pred_check
      _
    $region27: #{tpu_custom_call.1} parent=1 // pred_check_branch
      %109 = sbr.rel (0) target = $region29
    $region28: #{tpu_custom_call.1} parent=1 // pred_region
      %111 = dma.done [#allocation5], 16
    $region29: #{tpu_custom_call.1} parent=1 // pred_fallthru
      _
    %112 = vsyncpa [#allocation4], 1
    %113 = vsyncpa [#allocation7], 1
    %114 = vsyncpa [#allocation5], 1

</llo_original>
